<compile_context>
chip_gen: v6e
topology: v6e:2x2x1
jax: 0.10.0
libtpu: 0.0.40
codegen_flags: <defaults>
</compile_context>

<pallas_src>
import jax
import jax.numpy as jnp
import numpy as np
from jax.experimental import pallas as pl
from jax.experimental.pallas import tpu as pltpu

LANE = 128        # lane width of a vreg (last axis)
BATCH_ALIGN = 16  # bf16 sublane packing: keep batch tiles a multiple of 16


def _round_up(n, m):
    return ((n + m - 1) // m) * m


def _cdiv(a, b):
    return -(-a // b)


def mlp_kernel(x_ref, w1_ref, w2_ref, w3_ref, w4_ref, bh_ref, bo_ref, o_ref):
    """One batch tile of the fused MLP.

    x_ref:  (TB, P_in)      bf16  activations (zero-padded features)
    w1_ref: (P_in, P_hid)   bf16  fc1 weight, stored [in, out], zero-padded
    w2_ref: (P_hid, P_hid)  bf16  fc2 weight
    w3_ref: (P_hid, P_hid)  bf16  fc3 weight
    w4_ref: (P_hid, P_out)  bf16  fc4 weight
    bh_ref: (3, P_hid)      f32   stacked hidden biases (rows = fc1..fc3)
    bo_ref: (1, P_out)      f32   fc4 bias
    o_ref:  (TB, P_out)     f32   output (caller slices [:, :num_of_output])
    """
    bf16 = jnp.bfloat16
    f32 = jnp.float32

    h = jnp.dot(x_ref[...], w1_ref[...], preferred_element_type=f32) + bh_ref[0:1, :]
    h = jnp.maximum(h, 0.0).astype(bf16)

    h = jnp.dot(h, w2_ref[...], preferred_element_type=f32) + bh_ref[1:2, :]
    h = jnp.maximum(h, 0.0).astype(bf16)

    h = jnp.dot(h, w3_ref[...], preferred_element_type=f32) + bh_ref[2:3, :]
    h = jnp.maximum(h, 0.0).astype(bf16)

    out = jnp.dot(h, w4_ref[...], preferred_element_type=f32) + bo_ref[0:1, :]
    o_ref[...] = out.astype(o_ref.dtype)


def _choose_batch_tiling(B, tile_b):
    """Pick (tile rows, number of tiles): >=2 grid steps when splittable
    (v7x megacore + DMA pipelining) and <BATCH_ALIGN rows of batch padding."""
    tile_b = max(int(tile_b), BATCH_ALIGN)
    b_min = _round_up(max(B, 1), BATCH_ALIGN)
    n_tiles = _cdiv(b_min, tile_b)
    if n_tiles == 1 and b_min >= 2 * BATCH_ALIGN:
        n_tiles = 2
    tb = _round_up(_cdiv(b_min, n_tiles), BATCH_ALIGN)
    n_tiles = _cdiv(b_min, tb)
    return tb, n_tiles


def _mlp_xla(x, params):
    """Plain f32 XLA path (PyTorch semantics) for tiny, latency-bound batches."""
    h = x
    for name in ("fc1", "fc2", "fc3"):
        w, b = params[name]
        h = jnp.maximum(h @ w + b, 0.0)
    w, b = params["fc4"]
    return h @ w + b


def _run_pallas(xp, w1p, w2p, w3p, w4p, b_hid, b_out, *, tb, n_tiles,
                P_in, P_hid, P_out, cost, single_buffer_resident):
    resident_kw = {}
    if single_buffer_resident:
        # Resident operands (constant index_map) don't need double buffers.
        resident_kw = dict(pipeline_mode=pl.Buffered(1))

    def resident(shape):
        nd = len(shape)
        return pl.BlockSpec(shape, lambda i, _nd=nd: (0,) * _nd, **resident_kw)

    return pl.pallas_call(
        mlp_kernel,
        out_shape=jax.ShapeDtypeStruct((n_tiles * tb, P_out), jnp.float32),
        grid_spec=pl.GridSpec(
            grid=(n_tiles,),
            in_specs=[
                pl.BlockSpec((tb, P_in), lambda i: (i, 0)),  # x: tiled over batch
                resident((P_in, P_hid)),                     # w1 (VMEM-resident)
                resident((P_hid, P_hid)),                    # w2
                resident((P_hid, P_hid)),                    # w3
                resident((P_hid, P_out)),                    # w4
                resident((3, P_hid)),                        # stacked hidden biases
                resident((1, P_out)),                        # output bias
            ],
            out_specs=pl.BlockSpec((tb, P_out), lambda i: (i, 0)),
        ),
        compiler_params=pltpu.CompilerParams(
            dimension_semantics=("parallel",)),
        cost_estimate=cost,
    )(xp, w1p, w2p, w3p, w4p, b_hid, b_out)


def mlp_forward(x, params, *, tile_b=512, min_pallas_rows=128, force_pallas=False):
    """x: [B, num_of_input] float32.
    params: dict name -> (W, b) with W stored [in, out], b stored [1, out]."""
    w1, b1 = params["fc1"]
    w2, b2 = params["fc2"]
    w3, b3 = params["fc3"]
    w4, b4 = params["fc4"]

    B, n_in = x.shape
    n_hid = w1.shape[1]
    n_out = w4.shape[1]

    if not force_pallas and B < min_pallas_rows:
        # Tiny batch: the Pallas call is dominated by launch + DMA-setup
        # latency; XLA's fused GEMMs are already latency-optimal here.
        return _mlp_xla(x.astype(jnp.float32), params)

    # Per-layer lane-dense padded widths.
    P_in = _round_up(max(n_in, LANE), LANE)
    P_hid = _round_up(max(n_hid, LANE), LANE)
    P_out = _round_up(max(n_out, LANE), LANE)

    def pad_w(w, p_in, p_out):
        return jnp.pad(
            w, ((0, p_in - w.shape[0]), (0, p_out - w.shape[1]))
        ).astype(jnp.bfloat16)

    def pad_b(b, p):
        b = jnp.asarray(b, jnp.float32).reshape(1, -1)
        return jnp.pad(b, ((0, 0), (0, p - b.shape[1])))

    w1p = pad_w(w1, P_in, P_hid)
    w2p = pad_w(w2, P_hid, P_hid)
    w3p = pad_w(w3, P_hid, P_hid)
    w4p = pad_w(w4, P_hid, P_out)
    b_hid = jnp.concatenate(
        [pad_b(b1, P_hid), pad_b(b2, P_hid), pad_b(b3, P_hid)], axis=0)
    b_out = pad_b(b4, P_out)

    tb, n_tiles = _choose_batch_tiling(B, tile_b)
    Bp = n_tiles * tb

    # x streamed as bf16 (halves the dominant input DMA bytes).
    xp = jnp.pad(x, ((0, Bp - B), (0, P_in - n_in))).astype(jnp.bfloat16)

    # Cost estimate from the padded shapes actually executed.
    flops = 2 * Bp * (P_in * P_hid + 2 * P_hid * P_hid + P_hid * P_out)
    bytes_accessed = (
        xp.size * 2
        + (w1p.size + w2p.size + w3p.size + w4p.size) * 2
        + (b_hid.size + b_out.size) * 4
        + Bp * P_out * 4
    )
    cost = pl.CostEstimate(
        flops=flops, transcendentals=0, bytes_accessed=bytes_accessed)

    kwargs = dict(tb=tb, n_tiles=n_tiles, P_in=P_in, P_hid=P_hid, P_out=P_out,
                  cost=cost)
    try:
        out = _run_pallas(xp, w1p, w2p, w3p, w4p, b_hid, b_out,
                          single_buffer_resident=True, **kwargs)
    except Exception:
        # Older jax without Buffered(1) support: fall back to default
        # double-buffered resident operands (correctness identical).
        out = _run_pallas(xp, w1p, w2p, w3p, w4p, b_hid, b_out,
                          single_buffer_resident=False, **kwargs)

    return out[:B, :n_out]


def init_linear(key, fan_in, fan_out):
    """Deterministic init mimicking torch.nn.Linear default:
    U(-1/sqrt(fan_in), 1/sqrt(fan_in)). W stored [in, out], b stored [1, out]."""
    kw, kb = jax.random.split(key)
    bound = 1.0 / np.sqrt(fan_in)
    w = jax.random.uniform(kw, (fan_in, fan_out), jnp.float32, -bound, bound)
    b = jax.random.uniform(kb, (1, fan_out), jnp.float32, -bound, bound)
    return w, b


# Reference 1: bf16-operand / f32-accumulate math identical to the kernel.
def ref_bf16(x, params):
    bf16 = jnp.bfloat16
    h = x
    for name in ("fc1", "fc2", "fc3"):
        w, b = params[name]
        h = jnp.maximum(
            jnp.dot(h.astype(bf16), w.astype(bf16),
                    preferred_element_type=jnp.float32) + b, 0.0)
    w, b = params["fc4"]
    return jnp.dot(h.astype(bf16), w.astype(bf16),
                   preferred_element_type=jnp.float32) + b


# Reference 2: full f32 math (the PyTorch module's semantics).
def ref_f32(x, params):
    h = x
    for name in ("fc1", "fc2", "fc3"):
        w, b = params[name]
        h = jnp.maximum(h @ w + b, 0.0)
    w, b = params["fc4"]
    return h @ w + b


if __name__ == "__main__":
    # Small shapes consistent with the module's __init__ signature.
    batch = 8
    num_of_input = 16
    mean_hidden_dim = 32
    num_of_output = 8

    key = jax.random.PRNGKey(0)
    k_x, k_x2, k1, k2, k3, k4 = jax.random.split(key, 6)

    params = {
        "fc1": init_linear(k1, num_of_input, mean_hidden_dim),
        "fc2": init_linear(k2, mean_hidden_dim, mean_hidden_dim),
        "fc3": init_linear(k3, mean_hidden_dim, mean_hidden_dim),
        "fc4": init_linear(k4, mean_hidden_dim, num_of_output),
    }

    # 1) Demo-sized batch forced through the Pallas kernel.
    x_small = jax.random.normal(k_x, (batch, num_of_input), jnp.float32)
    out_small = jax.block_until_ready(
        mlp_forward(x_small, params, force_pallas=True))
    np.testing.assert_allclose(np.asarray(out_small),
                               np.asarray(ref_bf16(x_small, params)),
                               rtol=1e-3, atol=1e-3)
    np.testing.assert_allclose(np.asarray(out_small),
                               np.asarray(ref_f32(x_small, params)),
                               rtol=5e-2, atol=5e-2)

    # 2) Larger batch through the natural Pallas path
    #    (right-sized tiles, >= 2 grid steps for megacore + DMA pipelining).
    x_big = jax.random.normal(k_x2, (600, num_of_input), jnp.float32)
    out_big = jax.block_until_ready(mlp_forward(x_big, params))
    np.testing.assert_allclose(np.asarray(out_big),
                               np.asarray(ref_bf16(x_big, params)),
                               rtol=1e-3, atol=1e-3)
    np.testing.assert_allclose(np.asarray(out_big),
                               np.asarray(ref_f32(x_big, params)),
                               rtol=5e-2, atol=5e-2)

    # 3) Tiny batch via natural dispatch hits the XLA f32 fallback path.
    out_fb = jax.block_until_ready(mlp_forward(x_small, params))
    np.testing.assert_allclose(np.asarray(out_fb),
                               np.asarray(ref_f32(x_small, params)),
                               rtol=1e-5, atol=1e-5)

    print("KERNEL_OK")
</pallas_src>

<mosaic_0001>
module attributes {stable_mosaic.version = 11 : i64} {
  func.func @mlp_kernel(%arg0: i32, %arg1: memref<16x128xbf16, #tpu.memory_space<vmem>>, %arg2: memref<128x128xbf16, #tpu.memory_space<vmem>>, %arg3: memref<128x128xbf16, #tpu.memory_space<vmem>>, %arg4: memref<128x128xbf16, #tpu.memory_space<vmem>>, %arg5: memref<128x128xbf16, #tpu.memory_space<vmem>>, %arg6: memref<3x128xf32, #tpu.memory_space<vmem>>, %arg7: memref<1x128xf32, #tpu.memory_space<vmem>>, %arg8: memref<16x128xf32, #tpu.memory_space<vmem>>) attributes {dimension_semantics = [#tpu.dimension_semantics<parallel>], iteration_bounds = array<i64: 1>, scalar_prefetch = 0 : i64, scratch_operands = 0 : i64, tpu.core_type = #tpu.core_type<tc>, window_params = [{transform_indices = @transform_0, window_bounds = array<i64: 16, 128>}, {pipeline_mode = #tpu.pipeline_mode<synchronous>, transform_indices = @transform_1, window_bounds = array<i64: 128, 128>}, {pipeline_mode = #tpu.pipeline_mode<synchronous>, transform_indices = @transform_2, window_bounds = array<i64: 128, 128>}, {pipeline_mode = #tpu.pipeline_mode<synchronous>, transform_indices = @transform_3, window_bounds = array<i64: 128, 128>}, {pipeline_mode = #tpu.pipeline_mode<synchronous>, transform_indices = @transform_4, window_bounds = array<i64: 128, 128>}, {pipeline_mode = #tpu.pipeline_mode<synchronous>, transform_indices = @transform_5, window_bounds = array<i64: 3, 128>}, {pipeline_mode = #tpu.pipeline_mode<synchronous>, transform_indices = @transform_6, window_bounds = array<i64: 1, 128>}, {transform_indices = @transform_7, window_bounds = array<i64: 16, 128>}]} {
    %c0 = arith.constant 0 : index
    %c0_0 = arith.constant 0 : index
    %0 = vector.load %arg1[%c0, %c0_0] : memref<16x128xbf16, #tpu.memory_space<vmem>>, vector<16x128xbf16>
    %c0_1 = arith.constant 0 : index
    %c0_2 = arith.constant 0 : index
    %1 = vector.load %arg2[%c0_1, %c0_2] : memref<128x128xbf16, #tpu.memory_space<vmem>>, vector<128x128xbf16>
    %cst = arith.constant dense<0.000000e+00> : vector<16x128xf32>
    %2 = tpu.matmul %0, %1, %cst {dimension_numbers = #tpu.dot_dimension_numbers<[1], [0], [0], [1], [0, 0, 1, 1], [], []>} : vector<16x128xbf16>, vector<128x128xbf16>, vector<16x128xf32> -> vector<16x128xf32>
    %c0_3 = arith.constant 0 : index
    %c0_4 = arith.constant 0 : index
    %3 = vector.load %arg6[%c0_3, %c0_4] : memref<3x128xf32, #tpu.memory_space<vmem>>, vector<1x128xf32>
    %4 = vector.broadcast %3 : vector<1x128xf32> to vector<16x128xf32>
    %5 = arith.addf %2, %4 : vector<16x128xf32>
    %cst_5 = arith.constant 0.000000e+00 : f32
    %6 = vector.broadcast %cst_5 : f32 to vector<16x128xf32>
    %7 = arith.maximumf %5, %6 : vector<16x128xf32>
    %8 = arith.truncf %7 : vector<16x128xf32> to vector<16x128xbf16>
    %c0_6 = arith.constant 0 : index
    %c0_7 = arith.constant 0 : index
    %9 = vector.load %arg3[%c0_6, %c0_7] : memref<128x128xbf16, #tpu.memory_space<vmem>>, vector<128x128xbf16>
    %cst_8 = arith.constant dense<0.000000e+00> : vector<16x128xf32>
    %10 = tpu.matmul %8, %9, %cst_8 {dimension_numbers = #tpu.dot_dimension_numbers<[1], [0], [0], [1], [0, 0, 1, 1], [], []>} : vector<16x128xbf16>, vector<128x128xbf16>, vector<16x128xf32> -> vector<16x128xf32>
    %c1 = arith.constant 1 : index
    %c0_9 = arith.constant 0 : index
    %11 = vector.load %arg6[%c1, %c0_9] : memref<3x128xf32, #tpu.memory_space<vmem>>, vector<1x128xf32>
    %12 = vector.broadcast %11 : vector<1x128xf32> to vector<16x128xf32>
    %13 = arith.addf %10, %12 : vector<16x128xf32>
    %cst_10 = arith.constant 0.000000e+00 : f32
    %14 = vector.broadcast %cst_10 : f32 to vector<16x128xf32>
    %15 = arith.maximumf %13, %14 : vector<16x128xf32>
    %16 = arith.truncf %15 : vector<16x128xf32> to vector<16x128xbf16>
    %c0_11 = arith.constant 0 : index
    %c0_12 = arith.constant 0 : index
    %17 = vector.load %arg4[%c0_11, %c0_12] : memref<128x128xbf16, #tpu.memory_space<vmem>>, vector<128x128xbf16>
    %cst_13 = arith.constant dense<0.000000e+00> : vector<16x128xf32>
    %18 = tpu.matmul %16, %17, %cst_13 {dimension_numbers = #tpu.dot_dimension_numbers<[1], [0], [0], [1], [0, 0, 1, 1], [], []>} : vector<16x128xbf16>, vector<128x128xbf16>, vector<16x128xf32> -> vector<16x128xf32>
    %c2 = arith.constant 2 : index
    %c0_14 = arith.constant 0 : index
    %19 = vector.load %arg6[%c2, %c0_14] : memref<3x128xf32, #tpu.memory_space<vmem>>, vector<1x128xf32>
    %20 = vector.broadcast %19 : vector<1x128xf32> to vector<16x128xf32>
    %21 = arith.addf %18, %20 : vector<16x128xf32>
    %cst_15 = arith.constant 0.000000e+00 : f32
    %22 = vector.broadcast %cst_15 : f32 to vector<16x128xf32>
    %23 = arith.maximumf %21, %22 : vector<16x128xf32>
    %24 = arith.truncf %23 : vector<16x128xf32> to vector<16x128xbf16>
    %c0_16 = arith.constant 0 : index
    %c0_17 = arith.constant 0 : index
    %25 = vector.load %arg5[%c0_16, %c0_17] : memref<128x128xbf16, #tpu.memory_space<vmem>>, vector<128x128xbf16>
    %cst_18 = arith.constant dense<0.000000e+00> : vector<16x128xf32>
    %26 = tpu.matmul %24, %25, %cst_18 {dimension_numbers = #tpu.dot_dimension_numbers<[1], [0], [0], [1], [0, 0, 1, 1], [], []>} : vector<16x128xbf16>, vector<128x128xbf16>, vector<16x128xf32> -> vector<16x128xf32>
    %c0_19 = arith.constant 0 : index
    %c0_20 = arith.constant 0 : index
    %27 = vector.load %arg7[%c0_19, %c0_20] : memref<1x128xf32, #tpu.memory_space<vmem>>, vector<1x128xf32>
    %28 = vector.broadcast %27 : vector<1x128xf32> to vector<16x128xf32>
    %29 = arith.addf %26, %28 : vector<16x128xf32>
    %c0_21 = arith.constant 0 : index
    %c0_22 = arith.constant 0 : index
    %30 = vector.load %arg8[%c0_21, %c0_22] : memref<16x128xf32, #tpu.memory_space<vmem>>, vector<16x128xf32>
    tpu.vector_store %arg8[%c0_21, %c0_22], %29 {strides = array<i32>} : memref<16x128xf32, #tpu.memory_space<vmem>>, vector<16x128xf32>,
    return
  }
  func.func @transform_0(%arg0: i32) -> (i32, i32) {
    %c0_i32 = arith.constant 0 : i32
    %c0_i32_0 = arith.constant 0 : i32
    return %arg0, %c0_i32 : i32, i32
  }
  func.func @transform_1(%arg0: i32) -> (i32, i32) {
    %c0_i32 = arith.constant 0 : i32
    %c0_i32_0 = arith.constant 0 : i32
    %c0_i32_1 = arith.constant 0 : i32
    return %c0_i32, %c0_i32_0 : i32, i32
  }
  func.func @transform_2(%arg0: i32) -> (i32, i32) {
    %c0_i32 = arith.constant 0 : i32
    %c0_i32_0 = arith.constant 0 : i32
    %c0_i32_1 = arith.constant 0 : i32
    return %c0_i32, %c0_i32_0 : i32, i32
  }
  func.func @transform_3(%arg0: i32) -> (i32, i32) {
    %c0_i32 = arith.constant 0 : i32
    %c0_i32_0 = arith.constant 0 : i32
    %c0_i32_1 = arith.constant 0 : i32
    return %c0_i32, %c0_i32_0 : i32, i32
  }
  func.func @transform_4(%arg0: i32) -> (i32, i32) {
    %c0_i32 = arith.constant 0 : i32
    %c0_i32_0 = arith.constant 0 : i32
    %c0_i32_1 = arith.constant 0 : i32
    return %c0_i32, %c0_i32_0 : i32, i32
  }
  func.func @transform_5(%arg0: i32) -> (i32, i32) {
    %c0_i32 = arith.constant 0 : i32
    %c0_i32_0 = arith.constant 0 : i32
    %c0_i32_1 = arith.constant 0 : i32
    return %c0_i32, %c0_i32_0 : i32, i32
  }
  func.func @transform_6(%arg0: i32) -> (i32, i32) {
    %c0_i32 = arith.constant 0 : i32
    %c0_i32_0 = arith.constant 0 : i32
    %c0_i32_1 = arith.constant 0 : i32
    return %c0_i32, %c0_i32_0 : i32, i32
  }
  func.func @transform_7(%arg0: i32) -> (i32, i32) {
    %c0_i32 = arith.constant 0 : i32
    %c0_i32_0 = arith.constant 0 : i32
    return %arg0, %c0_i32 : i32, i32
  }
}

module attributes {stable_mosaic.version = 11 : i64} {
  func.func @mlp_kernel(%arg0: i32, %arg1: memref<16x128xbf16, #tpu.memory_space<vmem>>, %arg2: memref<128x128xbf16, #tpu.memory_space<vmem>>, %arg3: memref<128x128xbf16, #tpu.memory_space<vmem>>, %arg4: memref<128x128xbf16, #tpu.memory_space<vmem>>, %arg5: memref<128x128xbf16, #tpu.memory_space<vmem>>, %arg6: memref<3x128xf32, #tpu.memory_space<vmem>>, %arg7: memref<1x128xf32, #tpu.memory_space<vmem>>, %arg8: memref<16x128xf32, #tpu.memory_space<vmem>>) attributes {dimension_semantics = [#tpu.dimension_semantics<parallel>], iteration_bounds = array<i64: 1>, scalar_prefetch = 0 : i64, scratch_operands = 0 : i64, tpu.core_type = #tpu.core_type<tc>, window_params = [{transform_indices = @transform_0, window_bounds = array<i64: 16, 128>}, {pipeline_mode = #tpu.pipeline_mode<synchronous>, transform_indices = @transform_1, window_bounds = array<i64: 128, 128>}, {pipeline_mode = #tpu.pipeline_mode<synchronous>, transform_indices = @transform_2, window_bounds = array<i64: 128, 128>}, {pipeline_mode = #tpu.pipeline_mode<synchronous>, transform_indices = @transform_3, window_bounds = array<i64: 128, 128>}, {pipeline_mode = #tpu.pipeline_mode<synchronous>, transform_indices = @transform_4, window_bounds = array<i64: 128, 128>}, {pipeline_mode = #tpu.pipeline_mode<synchronous>, transform_indices = @transform_5, window_bounds = array<i64: 3, 128>}, {pipeline_mode = #tpu.pipeline_mode<synchronous>, transform_indices = @transform_6, window_bounds = array<i64: 1, 128>}, {transform_indices = @transform_7, window_bounds = array<i64: 16, 128>}]} {
    %c0 = arith.constant 0 : index
    %c0_0 = arith.constant 0 : index
    %0 = vector.load %arg1[%c0, %c0_0] : memref<16x128xbf16, #tpu.memory_space<vmem>>, vector<16x128xbf16>
    %c0_1 = arith.constant 0 : index
    %c0_2 = arith.constant 0 : index
    %1 = vector.load %arg2[%c0_1, %c0_2] : memref<128x128xbf16, #tpu.memory_space<vmem>>, vector<128x128xbf16>
    %cst = arith.constant dense<0.000000e+00> : vector<16x128xf32>
    %2 = tpu.matmul %0, %1, %cst {dimension_numbers = #tpu.dot_dimension_numbers<[1], [0], [0], [1], [0, 0, 1, 1], [], []>} : vector<16x128xbf16>, vector<128x128xbf16>, vector<16x128xf32> -> vector<16x128xf32>
    %c0_3 = arith.constant 0 : index
    %c0_4 = arith.constant 0 : index
    %3 = vector.load %arg6[%c0_3, %c0_4] : memref<3x128xf32, #tpu.memory_space<vmem>>, vector<1x128xf32>
    %4 = vector.broadcast %3 : vector<1x128xf32> to vector<16x128xf32>
    %5 = arith.addf %2, %4 : vector<16x128xf32>
    %cst_5 = arith.constant 0.000000e+00 : f32
    %6 = vector.broadcast %cst_5 : f32 to vector<16x128xf32>
    %7 = arith.maximumf %5, %6 : vector<16x128xf32>
    %8 = arith.truncf %7 : vector<16x128xf32> to vector<16x128xbf16>
    %c0_6 = arith.constant 0 : index
    %c0_7 = arith.constant 0 : index
    %9 = vector.load %arg3[%c0_6, %c0_7] : memref<128x128xbf16, #tpu.memory_space<vmem>>, vector<128x128xbf16>
    %cst_8 = arith.constant dense<0.000000e+00> : vector<16x128xf32>
    %10 = tpu.matmul %8, %9, %cst_8 {dimension_numbers = #tpu.dot_dimension_numbers<[1], [0], [0], [1], [0, 0, 1, 1], [], []>} : vector<16x128xbf16>, vector<128x128xbf16>, vector<16x128xf32> -> vector<16x128xf32>
    %c1 = arith.constant 1 : index
    %c0_9 = arith.constant 0 : index
    %11 = vector.load %arg6[%c1, %c0_9] : memref<3x128xf32, #tpu.memory_space<vmem>>, vector<1x128xf32>
    %12 = vector.broadcast %11 : vector<1x128xf32> to vector<16x128xf32>
    %13 = arith.addf %10, %12 : vector<16x128xf32>
    %cst_10 = arith.constant 0.000000e+00 : f32
    %14 = vector.broadcast %cst_10 : f32 to vector<16x128xf32>
    %15 = arith.maximumf %13, %14 : vector<16x128xf32>
    %16 = arith.truncf %15 : vector<16x128xf32> to vector<16x128xbf16>
    %c0_11 = arith.constant 0 : index
    %c0_12 = arith.constant 0 : index
    %17 = vector.load %arg4[%c0_11, %c0_12] : memref<128x128xbf16, #tpu.memory_space<vmem>>, vector<128x128xbf16>
    %cst_13 = arith.constant dense<0.000000e+00> : vector<16x128xf32>
    %18 = tpu.matmul %16, %17, %cst_13 {dimension_numbers = #tpu.dot_dimension_numbers<[1], [0], [0], [1], [0, 0, 1, 1], [], []>} : vector<16x128xbf16>, vector<128x128xbf16>, vector<16x128xf32> -> vector<16x128xf32>
    %c2 = arith.constant 2 : index
    %c0_14 = arith.constant 0 : index
    %19 = vector.load %arg6[%c2, %c0_14] : memref<3x128xf32, #tpu.memory_space<vmem>>, vector<1x128xf32>
    %20 = vector.broadcast %19 : vector<1x128xf32> to vector<16x128xf32>
    %21 = arith.addf %18, %20 : vector<16x128xf32>
    %cst_15 = arith.constant 0.000000e+00 : f32
    %22 = vector.broadcast %cst_15 : f32 to vector<16x128xf32>
    %23 = arith.maximumf %21, %22 : vector<16x128xf32>
    %24 = arith.truncf %23 : vector<16x128xf32> to vector<16x128xbf16>
    %c0_16 = arith.constant 0 : index
    %c0_17 = arith.constant 0 : index
    %25 = vector.load %arg5[%c0_16, %c0_17] : memref<128x128xbf16, #tpu.memory_space<vmem>>, vector<128x128xbf16>
    %cst_18 = arith.constant dense<0.000000e+00> : vector<16x128xf32>
    %26 = tpu.matmul %24, %25, %cst_18 {dimension_numbers = #tpu.dot_dimension_numbers<[1], [0], [0], [1], [0, 0, 1, 1], [], []>} : vector<16x128xbf16>, vector<128x128xbf16>, vector<16x128xf32> -> vector<16x128xf32>
    %c0_19 = arith.constant 0 : index
    %c0_20 = arith.constant 0 : index
    %27 = vector.load %arg7[%c0_19, %c0_20] : memref<1x128xf32, #tpu.memory_space<vmem>>, vector<1x128xf32>
    %28 = vector.broadcast %27 : vector<1x128xf32> to vector<16x128xf32>
    %29 = arith.addf %26, %28 : vector<16x128xf32>
    %c0_21 = arith.constant 0 : index
    %c0_22 = arith.constant 0 : index
    %30 = vector.load %arg8[%c0_21, %c0_22] : memref<16x128xf32, #tpu.memory_space<vmem>>, vector<16x128xf32>
    tpu.vector_store %arg8[%c0_21, %c0_22], %29 {strides = array<i32>} : memref<16x128xf32, #tpu.memory_space<vmem>>, vector<16x128xf32>,
    return
  }
  func.func @transform_0(%arg0: i32) -> (i32, i32) {
    %c0_i32 = arith.constant 0 : i32
    %c0_i32_0 = arith.constant 0 : i32
    return %arg0, %c0_i32 : i32, i32
  }
  func.func @transform_1(%arg0: i32) -> (i32, i32) {
    %c0_i32 = arith.constant 0 : i32
    %c0_i32_0 = arith.constant 0 : i32
    %c0_i32_1 = arith.constant 0 : i32
    return %c0_i32, %c0_i32_0 : i32, i32
  }
  func.func @transform_2(%arg0: i32) -> (i32, i32) {
    %c0_i32 = arith.constant 0 : i32
    %c0_i32_0 = arith.constant 0 : i32
    %c0_i32_1 = arith.constant 0 : i32
    return %c0_i32, %c0_i32_0 : i32, i32
  }
  func.func @transform_3(%arg0: i32) -> (i32, i32) {
    %c0_i32 = arith.constant 0 : i32
    %c0_i32_0 = arith.constant 0 : i32
    %c0_i32_1 = arith.constant 0 : i32
    return %c0_i32, %c0_i32_0 : i32, i32
  }
  func.func @transform_4(%arg0: i32) -> (i32, i32) {
    %c0_i32 = arith.constant 0 : i32
    %c0_i32_0 = arith.constant 0 : i32
    %c0_i32_1 = arith.constant 0 : i32
    return %c0_i32, %c0_i32_0 : i32, i32
  }
  func.func @transform_5(%arg0: i32) -> (i32, i32) {
    %c0_i32 = arith.constant 0 : i32
    %c0_i32_0 = arith.constant 0 : i32
    %c0_i32_1 = arith.constant 0 : i32
    return %c0_i32, %c0_i32_0 : i32, i32
  }
  func.func @transform_6(%arg0: i32) -> (i32, i32) {
    %c0_i32 = arith.constant 0 : i32
    %c0_i32_0 = arith.constant 0 : i32
    %c0_i32_1 = arith.constant 0 : i32
    return %c0_i32, %c0_i32_0 : i32, i32
  }
  func.func @transform_7(%arg0: i32) -> (i32, i32) {
    %c0_i32 = arith.constant 0 : i32
    %c0_i32_0 = arith.constant 0 : i32
    return %arg0, %c0_i32 : i32, i32
  }
}

</mosaic_0001>

<llo_original>
// kernel: tpu_custom_call.1
$region0: #{tpu_custom_call.1}
  #allocation0 [shape = 'u32[]', space=smem, size = 0x4, offset = 0x4, fixed_abs, tag = 'smem constant byte address 0x4 - core index']
  #allocation1 [shape = 'u32[144,128]{1,0:T(1,128)}', space=vmem, size = 0x12000, scoped, tag = 'internal scratch']
  %s0 = inlined_call_operand.hbm [shape: bf16[16,128], index: 0, kind: input, shape index: {}]
  %s1 = inlined_call_operand.hbm [shape: bf16[128,128], index: 1, kind: input, shape index: {}]
  %s2 = inlined_call_operand.hbm [shape: bf16[128,128], index: 2, kind: input, shape index: {}]
  %s3 = inlined_call_operand.hbm [shape: bf16[128,128], index: 3, kind: input, shape index: {}]
  %s4 = inlined_call_operand.hbm [shape: bf16[128,128], index: 4, kind: input, shape index: {}]
  %s5 = inlined_call_operand.vmem [shape: f32[3,128], index: 5, kind: input, shape index: {}]
  %s6 = inlined_call_operand.vmem [shape: f32[1,128], index: 6, kind: input, shape index: {}]
  %s7 = inlined_call_operand.hbm [shape: f32[16,128], index: 7, kind: output, shape index: {}]
  %s8 = sld [smem:[#allocation0]]
  $region58: #{tpu_custom_call.1} parent=0
    _
  %s10 = ssub.s32 1, %s8
  %s11 = scalar_select 0, %s10, %s8
  $region1: #{tpu_custom_call.1} parent=0
    #allocation2 [shape = 'u8[4096]{0}', space=vmem, size = 0x1000, scoped, tag = 'input window, operand 0, single buffered']
    #allocation3 [shape = 's32[1]{0}', space=sflag, size = 0x4, scoped, tag = 'scoped memory for tpu_custom_call.1']
    #allocation4 [shape = 's32[1]{0}', space=sflag, size = 0x4, scoped, tag = 'scoped memory for tpu_custom_call.1']
    #allocation5 [shape = 'u8[32768]{0}', space=vmem, size = 0x8000, scoped, tag = 'input window, operand 1, single buffered']
    #allocation6 [shape = 's32[1]{0}', space=sflag, size = 0x4, scoped, tag = 'scoped memory for tpu_custom_call.1']
    #allocation7 [shape = 'u8[32768]{0}', space=vmem, size = 0x8000, scoped, tag = 'input window, operand 2, single buffered']
    #allocation8 [shape = 'u8[32768]{0}', space=vmem, size = 0x8000, scoped, tag = 'input window, operand 3, single buffered']
    #allocation9 [shape = 's32[1]{0}', space=sflag, size = 0x4, scoped, tag = 'scoped memory for tpu_custom_call.1']
    #allocation10 [shape = 'u8[32768]{0}', space=vmem, size = 0x8000, scoped, tag = 'input window, operand 4, single buffered']
    #allocation11 [shape = 'u8[8192]{0}', space=vmem, size = 0x2000, scoped, tag = 'output window, operand 0, single buffered']
    %12 = vsyncpa [#allocation3], 0
    %13 = vsyncpa [#allocation6], 0
    %14 = vsyncpa [#allocation9], 0
    %15 = vsyncpa [#allocation4], 0
    // Predicated region
    $region2: #{tpu_custom_call.1} parent=1 // pred_check
      _
    $region3: #{tpu_custom_call.1} parent=1 // pred_check_branch
      %17 = sbr.rel (0) target = $region5
    $region4: #{tpu_custom_call.1} parent=1 // pred_region
      %s19 = ssub.s32 128, 128
      %20 = vsyncadd [#allocation3], %s19
      %s21 = sshll.u32 [#allocation2], 4
      %s22 = int_to_ptr.vmem [resolvable:$true] %s21
      %27 = dma.hbm_to_vmem [thread:$0]  %s0, 128, %s22, [#allocation3], 64, 64, 4
    $region5: #{tpu_custom_call.1} parent=1 // pred_fallthru
      _
    // Predicated region
    $region6: #{tpu_custom_call.1} parent=1 // pred_check
      _
    $region7: #{tpu_custom_call.1} parent=1 // pred_check_branch
      %29 = sbr.rel (0) target = $region9
    $region8: #{tpu_custom_call.1} parent=1 // pred_region
      %s31 = ssub.s32 1024, 1024
      %32 = vsyncadd [#allocation6], %s31
      %s33 = sshll.u32 [#allocation5], 4
      %s34 = int_to_ptr.vmem [resolvable:$true] %s33
      %39 = dma.hbm_to_vmem [thread:$0]  %s1, 1024, %s34, [#allocation6], 64, 64, 4
    $region9: #{tpu_custom_call.1} parent=1 // pred_fallthru
      _
    // Predicated region
    $region10: #{tpu_custom_call.1} parent=1 // pred_check
      _
    $region11: #{tpu_custom_call.1} parent=1 // pred_check_branch
      %41 = sbr.rel (0) target = $region13
    $region12: #{tpu_custom_call.1} parent=1 // pred_region
      %s43 = ssub.s32 1024, 1024
      %44 = vsyncadd [#allocation6], %s43
      %s45 = sshll.u32 [#allocation7], 4
      %s46 = int_to_ptr.vmem [resolvable:$true] %s45
      %51 = dma.hbm_to_vmem [thread:$0]  %s2, 1024, %s46, [#allocation6], 64, 64, 4
    $region13: #{tpu_custom_call.1} parent=1 // pred_fallthru
      _
    // Predicated region
    $region14: #{tpu_custom_call.1} parent=1 // pred_check
      _
    $region15: #{tpu_custom_call.1} parent=1 // pred_check_branch
      %53 = sbr.rel (0) target = $region17
    $region16: #{tpu_custom_call.1} parent=1 // pred_region
      %s55 = ssub.s32 1024, 1024
      %56 = vsyncadd [#allocation9], %s55
      %s57 = sshll.u32 [#allocation8], 4
      %s58 = int_to_ptr.vmem [resolvable:$true] %s57
      %63 = dma.hbm_to_vmem [thread:$0]  %s3, 1024, %s58, [#allocation9], 64, 64, 4
    $region17: #{tpu_custom_call.1} parent=1 // pred_fallthru
      _
    // Predicated region
    $region18: #{tpu_custom_call.1} parent=1 // pred_check
      _
    $region19: #{tpu_custom_call.1} parent=1 // pred_check_branch
      %65 = sbr.rel (0) target = $region21
    $region20: #{tpu_custom_call.1} parent=1 // pred_region
      %s67 = ssub.s32 1024, 1024
      %68 = vsyncadd [#allocation9], %s67
      %s69 = sshll.u32 [#allocation10], 4
      %s70 = int_to_ptr.vmem [resolvable:$true] %s69
      %75 = dma.hbm_to_vmem [thread:$0]  %s4, 1024, %s70, [#allocation9], 64, 64, 4
    $region21: #{tpu_custom_call.1} parent=1 // pred_fallthru
      _
    // Predicated region
    $region22: #{tpu_custom_call.1} parent=1 // pred_check
      _
    $region23: #{tpu_custom_call.1} parent=1 // pred_check_branch
      %77 = sbr.rel (0) target = $region25
    $region24: #{tpu_custom_call.1} parent=1 // pred_region
      _
    $region25: #{tpu_custom_call.1} parent=1 // pred_fallthru
      _
    // Predicated region
    $region26: #{tpu_custom_call.1} parent=1 // pred_check
      _
    $region27: #{tpu_custom_call.1} parent=1 // pred_check_branch
      %79 = sbr.rel (0) target = $region29
    $region28: #{tpu_custom_call.1} parent=1 // pred_region
      _
    $region29: #{tpu_custom_call.1} parent=1 // pred_fallthru
      _
    // Predicated region
    $region30: #{tpu_custom_call.1} parent=1 // pred_check
      _
    $region31: #{tpu_custom_call.1} parent=1 // pred_check_branch
      %81 = sbr.rel (0) target = $region33
    $region32: #{tpu_custom_call.1} parent=1 // pred_region
      %82 = dma.done [#allocation3], 128
    $region33: #{tpu_custom_call.1} parent=1 // pred_fallthru
      _
    // Predicated region
    $region34: #{tpu_custom_call.1} parent=1 // pred_check
      _
    $region35: #{tpu_custom_call.1} parent=1 // pred_check_branch
      %84 = sbr.rel (0) target = $region37
    $region36: #{tpu_custom_call.1} parent=1 // pred_region
      %85 = dma.done [#allocation6], 1024
    $region37: #{tpu_custom_call.1} parent=1 // pred_fallthru
      _
    // Predicated region
    $region38: #{tpu_custom_call.1} parent=1 // pred_check
      _
    $region39: #{tpu_custom_call.1} parent=1 // pred_check_branch
      %87 = sbr.rel (0) target = $region41
    $region40: #{tpu_custom_call.1} parent=1 // pred_region
      %88 = dma.done [#allocation6], 1024
    $region41: #{tpu_custom_call.1} parent=1 // pred_fallthru
      _
    // Predicated region
    $region42: #{tpu_custom_call.1} parent=1 // pred_check
      _
    $region43: #{tpu_custom_call.1} parent=1 // pred_check_branch
      %90 = sbr.rel (0) target = $region45
    $region44: #{tpu_custom_call.1} parent=1 // pred_region
      %91 = dma.done [#allocation9], 1024
    $region45: #{tpu_custom_call.1} parent=1 // pred_fallthru
      _
    // Predicated region
    $region46: #{tpu_custom_call.1} parent=1 // pred_check
      _
    $region47: #{tpu_custom_call.1} parent=1 // pred_check_branch
      %93 = sbr.rel (0) target = $region49
    $region48: #{tpu_custom_call.1} parent=1 // pred_region
      %94 = dma.done [#allocation9], 1024
    $region49: #{tpu_custom_call.1} parent=1 // pred_fallthru
      _
    %v96 = vld [vmem:[#allocation2] sm:$0xf]
    %v97 = vld [vmem:[#allocation2 + $0x4] sm:$0xf]
    %v98 = vld [vmem:[#allocation5] sm:$0xf]
    %v99 = vld [vmem:[#allocation5 + $0x4] sm:$0xf]
    %v100 = vld [vmem:[#allocation5 + $0x8] sm:$0xf]
    %v101 = vld [vmem:[#allocation5 + $0xc] sm:$0xf]
    %v102 = vld [vmem:[#allocation5 + $0x10] sm:$0xf]
    %v103 = vld [vmem:[#allocation5 + $0x14] sm:$0xf]
    %v104 = vld [vmem:[#allocation5 + $0x18] sm:$0xf]
    %v105 = vld [vmem:[#allocation5 + $0x1c] sm:$0xf]
    %v106 = vld [vmem:[#allocation5 + $0x20] sm:$0xf]
    %v107 = vld [vmem:[#allocation5 + $0x24] sm:$0xf]
    %v108 = vld [vmem:[#allocation5 + $0x28] sm:$0xf]
    %v109 = vld [vmem:[#allocation5 + $0x2c] sm:$0xf]
    %v110 = vld [vmem:[#allocation5 + $0x30] sm:$0xf]
    %v111 = vld [vmem:[#allocation5 + $0x34] sm:$0xf]
    %v112 = vld [vmem:[#allocation5 + $0x38] sm:$0xf]
    %v113 = vld [vmem:[#allocation5 + $0x3c] sm:$0xf]
    %v114 = vld [vmem:[%s5] sm:$0x1]
    %v115 = vlaneseq
    %v116 = vshrl.u32 %v115, 7
    %v117 = vsub.s32 0, %v116
    %v118 = vrot.slane %v114, %v117
    %v121 = vunpack.c.l.b16 %v96
    %v122 = vunpack.c.l.b16 %v97
    %v123 = vpack.c.b16 %v122, %v121
    %v141 = vunpack.c.l.b16 %v98
    %v142 = vunpack.c.l.b16 %v99
    %v143 = vunpack.c.l.b16 %v100
    %v144 = vunpack.c.l.b16 %v101
    %v145 = vunpack.c.l.b16 %v102
    %v146 = vunpack.c.l.b16 %v103
    %v147 = vunpack.c.l.b16 %v104
    %v148 = vunpack.c.l.b16 %v105
    %v149 = vunpack.c.l.b16 %v106
    %v150 = vunpack.c.l.b16 %v107
    %v151 = vunpack.c.l.b16 %v108
    %v152 = vunpack.c.l.b16 %v109
    %v153 = vunpack.c.l.b16 %v110
    %v154 = vunpack.c.l.b16 %v111
    %v155 = vunpack.c.l.b16 %v112
    %v156 = vunpack.c.l.b16 %v113
    %v157 = vpack.c.b16 %v142, %v141
    %v158 = vpack.c.b16 %v144, %v143
    %v159 = vpack.c.b16 %v146, %v145
    %v160 = vpack.c.b16 %v148, %v147
    %v161 = vpack.c.b16 %v150, %v149
    %v162 = vpack.c.b16 %v152, %v151
    %v163 = vpack.c.b16 %v154, %v153
    %v164 = vpack.c.b16 %v156, %v155
    %173 = vmatprep.subr.bf16.mxu0 0
    %174 = vmatpush1.bf16.msra.mxu0 %v164
    %175 = vmatprep.subr.bf16.mxu0 0
    %176 = vmatpush1.bf16.msra.mxu0 %v163
    %177 = vmatprep.subr.bf16.mxu0 0
    %178 = vmatpush1.bf16.msra.mxu0 %v162
    %179 = vmatprep.subr.bf16.mxu0 0
    %180 = vmatpush1.bf16.msra.mxu0 %v161
    %181 = vmatprep.subr.bf16.mxu0 0
    %182 = vmatpush1.bf16.msra.mxu0 %v160
    %183 = vmatprep.subr.bf16.mxu0 0
    %184 = vmatpush1.bf16.msra.mxu0 %v159
    %185 = vmatprep.subr.bf16.mxu0 0
    %186 = vmatpush1.bf16.msra.mxu0 %v158
    %187 = vmatprep.subr.bf16.mxu0 0
    %188 = vmatpush1.bf16.msra.mxu0 %v157
    %189 = vmatprep.subr.bf16.mxu0 0
    %190 = vmatpush2.bf16.msra.mxu0 0
    %191 = vmatprep.subr.bf16.mxu0 0
    %192 = vmatpush2.bf16.msra.mxu0 0
    %193 = vmatprep.subr.bf16.mxu0 0
    %194 = vmatpush2.bf16.msra.mxu0 0
    %195 = vmatprep.subr.bf16.mxu0 0
    %196 = vmatpush2.bf16.msra.mxu0 0
    %197 = vmatprep.subr.bf16.mxu0 0
    %198 = vmatpush2.bf16.msra.mxu0 0
    %199 = vmatprep.subr.bf16.mxu0 0
    %200 = vmatpush2.bf16.msra.mxu0 0
    %201 = vmatprep.subr.bf16.mxu0 0
    %202 = vmatpush2.bf16.msra.mxu0 0
    %203 = vmatprep.subr.bf16.mxu0 0
    %204 = vmatpush2.bf16.msra.mxu0 0
    %205 = vmatprep.mubr.bf16.mxu0 0
    %206 = vmatmul.mubr.bf16.gmra.mxu0 %v123
    %v207 = vpop.f32.mrf.mxu0
    %v208 = vadd.f32 %v118, %v207
    %v209 = vpop.f32.mrf.mxu0
    %v210 = vpop.f32.mrf.mxu0
    %v211 = vadd.f32 %v118, %v210
    %v212 = vpop.f32.mrf.mxu0
    %213 = vdwg.mxu0
    %v214 = vmax.f32 %v208, 0.0
    %v215 = vmax.f32 %v211, 0.0
    %v216 = vpack.c.bf16 %v215, %v214
    %v217 = vld [vmem:[#allocation7] sm:$0xf]
    %v218 = vld [vmem:[#allocation7 + $0x4] sm:$0xf]
    %v219 = vld [vmem:[#allocation7 + $0x8] sm:$0xf]
    %v220 = vld [vmem:[#allocation7 + $0xc] sm:$0xf]
    %v221 = vld [vmem:[#allocation7 + $0x10] sm:$0xf]
    %v222 = vld [vmem:[#allocation7 + $0x14] sm:$0xf]
    %v223 = vld [vmem:[#allocation7 + $0x18] sm:$0xf]
    %v224 = vld [vmem:[#allocation7 + $0x1c] sm:$0xf]
    %v225 = vld [vmem:[#allocation7 + $0x20] sm:$0xf]
    %v226 = vld [vmem:[#allocation7 + $0x24] sm:$0xf]
    %v227 = vld [vmem:[#allocation7 + $0x28] sm:$0xf]
    %v228 = vld [vmem:[#allocation7 + $0x2c] sm:$0xf]
    %v229 = vld [vmem:[#allocation7 + $0x30] sm:$0xf]
    %v230 = vld [vmem:[#allocation7 + $0x34] sm:$0xf]
    %v231 = vld [vmem:[#allocation7 + $0x38] sm:$0xf]
    %v232 = vld [vmem:[#allocation7 + $0x3c] sm:$0xf]
    %v233 = vld [vmem:[%s5 + $0x1] sm:$0x1]
    %v234 = vlaneseq
    %v235 = vshrl.u32 %v234, 7
    %v236 = vsub.s32 0, %v235
    %v237 = vrot.slane %v233, %v236
    %v254 = vunpack.c.l.b16 %v217
    %v255 = vunpack.c.l.b16 %v218
    %v256 = vunpack.c.l.b16 %v219
    %v257 = vunpack.c.l.b16 %v220
    %v258 = vunpack.c.l.b16 %v221
    %v259 = vunpack.c.l.b16 %v222
    %v260 = vunpack.c.l.b16 %v223
    %v261 = vunpack.c.l.b16 %v224
    %v262 = vunpack.c.l.b16 %v225
    %v263 = vunpack.c.l.b16 %v226
    %v264 = vunpack.c.l.b16 %v227
    %v265 = vunpack.c.l.b16 %v228
    %v266 = vunpack.c.l.b16 %v229
    %v267 = vunpack.c.l.b16 %v230
    %v268 = vunpack.c.l.b16 %v231
    %v269 = vunpack.c.l.b16 %v232
    %v270 = vpack.c.b16 %v255, %v254
    %v271 = vpack.c.b16 %v257, %v256
    %v272 = vpack.c.b16 %v259, %v258
    %v273 = vpack.c.b16 %v261, %v260
    %v274 = vpack.c.b16 %v263, %v262
    %v275 = vpack.c.b16 %v265, %v264
    %v276 = vpack.c.b16 %v267, %v266
    %v277 = vpack.c.b16 %v269, %v268
    %286 = vmatprep.subr.bf16.mxu0 0
    %287 = vmatpush1.bf16.msra.mxu0 %v277
    %288 = vmatprep.subr.bf16.mxu0 0
    %289 = vmatpush1.bf16.msra.mxu0 %v276
    %290 = vmatprep.subr.bf16.mxu0 0
    %291 = vmatpush1.bf16.msra.mxu0 %v275
    %292 = vmatprep.subr.bf16.mxu0 0
    %293 = vmatpush1.bf16.msra.mxu0 %v274
    %294 = vmatprep.subr.bf16.mxu0 0
    %295 = vmatpush1.bf16.msra.mxu0 %v273
    %296 = vmatprep.subr.bf16.mxu0 0
    %297 = vmatpush1.bf16.msra.mxu0 %v272
    %298 = vmatprep.subr.bf16.mxu0 0
    %299 = vmatpush1.bf16.msra.mxu0 %v271
    %300 = vmatprep.subr.bf16.mxu0 0
    %301 = vmatpush1.bf16.msra.mxu0 %v270
    %302 = vmatprep.subr.bf16.mxu0 0
    %303 = vmatpush2.bf16.msra.mxu0 0
    %304 = vmatprep.subr.bf16.mxu0 0
    %305 = vmatpush2.bf16.msra.mxu0 0
    %306 = vmatprep.subr.bf16.mxu0 0
    %307 = vmatpush2.bf16.msra.mxu0 0
    %308 = vmatprep.subr.bf16.mxu0 0
    %309 = vmatpush2.bf16.msra.mxu0 0
    %310 = vmatprep.subr.bf16.mxu0 0
    %311 = vmatpush2.bf16.msra.mxu0 0
    %312 = vmatprep.subr.bf16.mxu0 0
    %313 = vmatpush2.bf16.msra.mxu0 0
    %314 = vmatprep.subr.bf16.mxu0 0
    %315 = vmatpush2.bf16.msra.mxu0 0
    %316 = vmatprep.subr.bf16.mxu0 0
    %317 = vmatpush2.bf16.msra.mxu0 0
    %318 = vmatprep.mubr.bf16.mxu0 0
    %319 = vmatmul.mubr.bf16.gmra.mxu0 %v216
    %v320 = vpop.f32.mrf.mxu0
    %v321 = vadd.f32 %v237, %v320
    %v322 = vpop.f32.mrf.mxu0
    %v323 = vpop.f32.mrf.mxu0
    %v324 = vadd.f32 %v237, %v323
    %v325 = vpop.f32.mrf.mxu0
    %326 = vdwg.mxu0
    %v327 = vmax.f32 %v321, 0.0
    %v328 = vmax.f32 %v324, 0.0
    %v329 = vpack.c.bf16 %v328, %v327
    %v330 = vld [vmem:[#allocation8] sm:$0xf]
    %v331 = vld [vmem:[#allocation8 + $0x4] sm:$0xf]
    %v332 = vld [vmem:[#allocation8 + $0x8] sm:$0xf]
    %v333 = vld [vmem:[#allocation8 + $0xc] sm:$0xf]
    %v334 = vld [vmem:[#allocation8 + $0x10] sm:$0xf]
    %v335 = vld [vmem:[#allocation8 + $0x14] sm:$0xf]
    %v336 = vld [vmem:[#allocation8 + $0x18] sm:$0xf]
    %v337 = vld [vmem:[#allocation8 + $0x1c] sm:$0xf]
    %v338 = vld [vmem:[#allocation8 + $0x20] sm:$0xf]
    %v339 = vld [vmem:[#allocation8 + $0x24] sm:$0xf]
    %v340 = vld [vmem:[#allocation8 + $0x28] sm:$0xf]
    %v341 = vld [vmem:[#allocation8 + $0x2c] sm:$0xf]
    %v342 = vld [vmem:[#allocation8 + $0x30] sm:$0xf]
    %v343 = vld [vmem:[#allocation8 + $0x34] sm:$0xf]
    %v344 = vld [vmem:[#allocation8 + $0x38] sm:$0xf]
    %v345 = vld [vmem:[#allocation8 + $0x3c] sm:$0xf]
    %v346 = vld [vmem:[%s5 + $0x2] sm:$0x1]
    %v347 = vlaneseq
    %v348 = vshrl.u32 %v347, 7
    %v349 = vsub.s32 0, %v348
    %v350 = vrot.slane %v346, %v349
    %v367 = vunpack.c.l.b16 %v330
    %v368 = vunpack.c.l.b16 %v331
    %v369 = vunpack.c.l.b16 %v332
    %v370 = vunpack.c.l.b16 %v333
    %v371 = vunpack.c.l.b16 %v334
    %v372 = vunpack.c.l.b16 %v335
    %v373 = vunpack.c.l.b16 %v336
    %v374 = vunpack.c.l.b16 %v337
    %v375 = vunpack.c.l.b16 %v338
    %v376 = vunpack.c.l.b16 %v339
    %v377 = vunpack.c.l.b16 %v340
    %v378 = vunpack.c.l.b16 %v341
    %v379 = vunpack.c.l.b16 %v342
    %v380 = vunpack.c.l.b16 %v343
    %v381 = vunpack.c.l.b16 %v344
    %v382 = vunpack.c.l.b16 %v345
    %v383 = vpack.c.b16 %v368, %v367
    %v384 = vpack.c.b16 %v370, %v369
    %v385 = vpack.c.b16 %v372, %v371
    %v386 = vpack.c.b16 %v374, %v373
    %v387 = vpack.c.b16 %v376, %v375
    %v388 = vpack.c.b16 %v378, %v377
    %v389 = vpack.c.b16 %v380, %v379
    %v390 = vpack.c.b16 %v382, %v381
    %399 = vmatprep.subr.bf16.mxu0 0
    %400 = vmatpush1.bf16.msra.mxu0 %v390
    %401 = vmatprep.subr.bf16.mxu0 0
    %402 = vmatpush1.bf16.msra.mxu0 %v389
    %403 = vmatprep.subr.bf16.mxu0 0
    %404 = vmatpush1.bf16.msra.mxu0 %v388
    %405 = vmatprep.subr.bf16.mxu0 0
    %406 = vmatpush1.bf16.msra.mxu0 %v387
    %407 = vmatprep.subr.bf16.mxu0 0
    %408 = vmatpush1.bf16.msra.mxu0 %v386
    %409 = vmatprep.subr.bf16.mxu0 0
    %410 = vmatpush1.bf16.msra.mxu0 %v385
    %411 = vmatprep.subr.bf16.mxu0 0
    %412 = vmatpush1.bf16.msra.mxu0 %v384
    %413 = vmatprep.subr.bf16.mxu0 0
    %414 = vmatpush1.bf16.msra.mxu0 %v383
    %415 = vmatprep.subr.bf16.mxu0 0
    %416 = vmatpush2.bf16.msra.mxu0 0
    %417 = vmatprep.subr.bf16.mxu0 0
    %418 = vmatpush2.bf16.msra.mxu0 0
    %419 = vmatprep.subr.bf16.mxu0 0
    %420 = vmatpush2.bf16.msra.mxu0 0
    %421 = vmatprep.subr.bf16.mxu0 0
    %422 = vmatpush2.bf16.msra.mxu0 0
    %423 = vmatprep.subr.bf16.mxu0 0
    %424 = vmatpush2.bf16.msra.mxu0 0
    %425 = vmatprep.subr.bf16.mxu0 0
    %426 = vmatpush2.bf16.msra.mxu0 0
    %427 = vmatprep.subr.bf16.mxu0 0
    %428 = vmatpush2.bf16.msra.mxu0 0
    %429 = vmatprep.subr.bf16.mxu0 0
    %430 = vmatpush2.bf16.msra.mxu0 0
    %431 = vmatprep.mubr.bf16.mxu0 0
    %432 = vmatmul.mubr.bf16.gmra.mxu0 %v329
    %v433 = vpop.f32.mrf.mxu0
    %v434 = vadd.f32 %v350, %v433
    %v435 = vpop.f32.mrf.mxu0
    %v436 = vpop.f32.mrf.mxu0
    %v437 = vadd.f32 %v350, %v436
    %v438 = vpop.f32.mrf.mxu0
    %439 = vdwg.mxu0
    %v440 = vmax.f32 %v434, 0.0
    %v441 = vmax.f32 %v437, 0.0
    %v442 = vpack.c.bf16 %v441, %v440
    %v443 = vld [vmem:[#allocation10] sm:$0xf]
    %v444 = vld [vmem:[#allocation10 + $0x4] sm:$0xf]
    %v445 = vld [vmem:[#allocation10 + $0x8] sm:$0xf]
    %v446 = vld [vmem:[#allocation10 + $0xc] sm:$0xf]
    %v447 = vld [vmem:[#allocation10 + $0x10] sm:$0xf]
    %v448 = vld [vmem:[#allocation10 + $0x14] sm:$0xf]
    %v449 = vld [vmem:[#allocation10 + $0x18] sm:$0xf]
    %v450 = vld [vmem:[#allocation10 + $0x1c] sm:$0xf]
    %v451 = vld [vmem:[#allocation10 + $0x20] sm:$0xf]
    %v452 = vld [vmem:[#allocation10 + $0x24] sm:$0xf]
    %v453 = vld [vmem:[#allocation10 + $0x28] sm:$0xf]
    %v454 = vld [vmem:[#allocation10 + $0x2c] sm:$0xf]
    %v455 = vld [vmem:[#allocation10 + $0x30] sm:$0xf]
    %v456 = vld [vmem:[#allocation10 + $0x34] sm:$0xf]
    %v457 = vld [vmem:[#allocation10 + $0x38] sm:$0xf]
    %v458 = vld [vmem:[#allocation10 + $0x3c] sm:$0xf]
    %v459 = vld [vmem:[%s6] sm:$0x1]
    %v461 = vlaneseq
    %v462 = vshrl.u32 %v461, 7
    %v463 = vsub.s32 0, %v462
    %v464 = vrot.slane %v459, %v463
    %v482 = vunpack.c.l.b16 %v443
    %v483 = vunpack.c.l.b16 %v444
    %v484 = vunpack.c.l.b16 %v445
    %v485 = vunpack.c.l.b16 %v446
    %v486 = vunpack.c.l.b16 %v447
    %v487 = vunpack.c.l.b16 %v448
    %v488 = vunpack.c.l.b16 %v449
    %v489 = vunpack.c.l.b16 %v450
    %v490 = vunpack.c.l.b16 %v451
    %v491 = vunpack.c.l.b16 %v452
    %v492 = vunpack.c.l.b16 %v453
    %v493 = vunpack.c.l.b16 %v454
    %v494 = vunpack.c.l.b16 %v455
    %v495 = vunpack.c.l.b16 %v456
    %v496 = vunpack.c.l.b16 %v457
    %v497 = vunpack.c.l.b16 %v458
    %v498 = vpack.c.b16 %v483, %v482
    %v499 = vpack.c.b16 %v485, %v484
    %v500 = vpack.c.b16 %v487, %v486
    %v501 = vpack.c.b16 %v489, %v488
    %v502 = vpack.c.b16 %v491, %v490
    %v503 = vpack.c.b16 %v493, %v492
    %v504 = vpack.c.b16 %v495, %v494
    %v505 = vpack.c.b16 %v497, %v496
    %514 = vmatprep.subr.bf16.mxu0 0
    %515 = vmatpush1.bf16.msra.mxu0 %v505
    %516 = vmatprep.subr.bf16.mxu0 0
    %517 = vmatpush1.bf16.msra.mxu0 %v504
    %518 = vmatprep.subr.bf16.mxu0 0
    %519 = vmatpush1.bf16.msra.mxu0 %v503
    %520 = vmatprep.subr.bf16.mxu0 0
    %521 = vmatpush1.bf16.msra.mxu0 %v502
    %522 = vmatprep.subr.bf16.mxu0 0
    %523 = vmatpush1.bf16.msra.mxu0 %v501
    %524 = vmatprep.subr.bf16.mxu0 0
    %525 = vmatpush1.bf16.msra.mxu0 %v500
    %526 = vmatprep.subr.bf16.mxu0 0
    %527 = vmatpush1.bf16.msra.mxu0 %v499
    %528 = vmatprep.subr.bf16.mxu0 0
    %529 = vmatpush1.bf16.msra.mxu0 %v498
    %530 = vmatprep.subr.bf16.mxu0 0
    %531 = vmatpush2.bf16.msra.mxu0 0
    %532 = vmatprep.subr.bf16.mxu0 0
    %533 = vmatpush2.bf16.msra.mxu0 0
    %534 = vmatprep.subr.bf16.mxu0 0
    %535 = vmatpush2.bf16.msra.mxu0 0
    %536 = vmatprep.subr.bf16.mxu0 0
    %537 = vmatpush2.bf16.msra.mxu0 0
    %538 = vmatprep.subr.bf16.mxu0 0
    %539 = vmatpush2.bf16.msra.mxu0 0
    %540 = vmatprep.subr.bf16.mxu0 0
    %541 = vmatpush2.bf16.msra.mxu0 0
    %542 = vmatprep.subr.bf16.mxu0 0
    %543 = vmatpush2.bf16.msra.mxu0 0
    %544 = vmatprep.subr.bf16.mxu0 0
    %545 = vmatpush2.bf16.msra.mxu0 0
    %546 = vmatprep.mubr.bf16.mxu0 0
    %547 = vmatmul.mubr.bf16.gmra.mxu0 %v442
    %v548 = vpop.f32.mrf.mxu0
    %v549 = vadd.f32 %v464, %v548
    %v550 = vpop.f32.mrf.mxu0
    %v551 = vpop.f32.mrf.mxu0
    %v552 = vadd.f32 %v464, %v551
    %v553 = vpop.f32.mrf.mxu0
    %554 = vdwg.mxu0
    %555 = vst [vmem:[#allocation11] sm:$0xff] %v549
    %556 = vst [vmem:[#allocation11 + $0x8] sm:$0xff] %v552
    // Predicated region
    $region50: #{tpu_custom_call.1} parent=1 // pred_check
      _
    $region51: #{tpu_custom_call.1} parent=1 // pred_check_branch
      %558 = sbr.rel (0) target = $region53
    $region52: #{tpu_custom_call.1} parent=1 // pred_region
      %s560 = ssub.s32 256, 256
      %561 = vsyncadd [#allocation4], %s560
      %s562 = sshll.u32 [#allocation11], 4
      %s563 = int_to_ptr.vmem [resolvable:$true] %s562
      %568 = dma.vmem_to_hbm [thread:$0]  %s563, 256, %s7, [#allocation4], 128, 128, 8
    $region53: #{tpu_custom_call.1} parent=1 // pred_fallthru
      _
    // Predicated region
    $region54: #{tpu_custom_call.1} parent=1 // pred_check
      _
    $region55: #{tpu_custom_call.1} parent=1 // pred_check_branch
      %570 = sbr.rel (0) target = $region57
    $region56: #{tpu_custom_call.1} parent=1 // pred_region
      %571 = dma.done [#allocation4], 256
    $region57: #{tpu_custom_call.1} parent=1 // pred_fallthru
      _
    %572 = vsyncpa [#allocation3], 1
    %573 = vsyncpa [#allocation6], 1
    %574 = vsyncpa [#allocation9], 1
    %575 = vsyncpa [#allocation4], 1

// kernel: tpu_custom_call.1
$region0: #{tpu_custom_call.1}
  #allocation0 [shape = 'u32[]', space=smem, size = 0x4, offset = 0x4, fixed_abs, tag = 'smem constant byte address 0x4 - core index']
  #allocation1 [shape = 'u32[144,128]{1,0:T(1,128)}', space=vmem, size = 0x12000, scoped, tag = 'internal scratch']
  %s0 = inlined_call_operand.hbm [shape: bf16[16,128], index: 0, kind: input, shape index: {}]
  %s1 = inlined_call_operand.hbm [shape: bf16[128,128], index: 1, kind: input, shape index: {}]
  %s2 = inlined_call_operand.hbm [shape: bf16[128,128], index: 2, kind: input, shape index: {}]
  %s3 = inlined_call_operand.hbm [shape: bf16[128,128], index: 3, kind: input, shape index: {}]
  %s4 = inlined_call_operand.hbm [shape: bf16[128,128], index: 4, kind: input, shape index: {}]
  %s5 = inlined_call_operand.vmem [shape: f32[3,128], index: 5, kind: input, shape index: {}]
  %s6 = inlined_call_operand.vmem [shape: f32[1,128], index: 6, kind: input, shape index: {}]
  %s7 = inlined_call_operand.hbm [shape: f32[16,128], index: 7, kind: output, shape index: {}]
  %s8 = sld [smem:[#allocation0]]
  $region58: #{tpu_custom_call.1} parent=0
    _
  %s10 = ssub.s32 1, %s8
  %s11 = scalar_select 0, %s10, %s8
  $region1: #{tpu_custom_call.1} parent=0
    #allocation2 [shape = 'u8[4096]{0}', space=vmem, size = 0x1000, scoped, tag = 'input window, operand 0, single buffered']
    #allocation3 [shape = 's32[1]{0}', space=sflag, size = 0x4, scoped, tag = 'scoped memory for tpu_custom_call.1']
    #allocation4 [shape = 's32[1]{0}', space=sflag, size = 0x4, scoped, tag = 'scoped memory for tpu_custom_call.1']
    #allocation5 [shape = 'u8[32768]{0}', space=vmem, size = 0x8000, scoped, tag = 'input window, operand 1, single buffered']
    #allocation6 [shape = 's32[1]{0}', space=sflag, size = 0x4, scoped, tag = 'scoped memory for tpu_custom_call.1']
    #allocation7 [shape = 'u8[32768]{0}', space=vmem, size = 0x8000, scoped, tag = 'input window, operand 2, single buffered']
    #allocation8 [shape = 'u8[32768]{0}', space=vmem, size = 0x8000, scoped, tag = 'input window, operand 3, single buffered']
    #allocation9 [shape = 's32[1]{0}', space=sflag, size = 0x4, scoped, tag = 'scoped memory for tpu_custom_call.1']
    #allocation10 [shape = 'u8[32768]{0}', space=vmem, size = 0x8000, scoped, tag = 'input window, operand 4, single buffered']
    #allocation11 [shape = 'u8[8192]{0}', space=vmem, size = 0x2000, scoped, tag = 'output window, operand 0, single buffered']
    %12 = vsyncpa [#allocation3], 0
    %13 = vsyncpa [#allocation6], 0
    %14 = vsyncpa [#allocation9], 0
    %15 = vsyncpa [#allocation4], 0
    // Predicated region
    $region2: #{tpu_custom_call.1} parent=1 // pred_check
      _
    $region3: #{tpu_custom_call.1} parent=1 // pred_check_branch
      %17 = sbr.rel (0) target = $region5
    $region4: #{tpu_custom_call.1} parent=1 // pred_region
      %s19 = ssub.s32 128, 128
      %20 = vsyncadd [#allocation3], %s19
      %s21 = sshll.u32 [#allocation2], 4
      %s22 = int_to_ptr.vmem [resolvable:$true] %s21
      %27 = dma.hbm_to_vmem [thread:$0]  %s0, 128, %s22, [#allocation3], 64, 64, 4
    $region5: #{tpu_custom_call.1} parent=1 // pred_fallthru
      _
    // Predicated region
    $region6: #{tpu_custom_call.1} parent=1 // pred_check
      _
    $region7: #{tpu_custom_call.1} parent=1 // pred_check_branch
      %29 = sbr.rel (0) target = $region9
    $region8: #{tpu_custom_call.1} parent=1 // pred_region
      %s31 = ssub.s32 1024, 1024
      %32 = vsyncadd [#allocation6], %s31
      %s33 = sshll.u32 [#allocation5], 4
      %s34 = int_to_ptr.vmem [resolvable:$true] %s33
      %39 = dma.hbm_to_vmem [thread:$0]  %s1, 1024, %s34, [#allocation6], 64, 64, 4
    $region9: #{tpu_custom_call.1} parent=1 // pred_fallthru
      _
    // Predicated region
    $region10: #{tpu_custom_call.1} parent=1 // pred_check
      _
    $region11: #{tpu_custom_call.1} parent=1 // pred_check_branch
      %41 = sbr.rel (0) target = $region13
    $region12: #{tpu_custom_call.1} parent=1 // pred_region
      %s43 = ssub.s32 1024, 1024
      %44 = vsyncadd [#allocation6], %s43
      %s45 = sshll.u32 [#allocation7], 4
      %s46 = int_to_ptr.vmem [resolvable:$true] %s45
      %51 = dma.hbm_to_vmem [thread:$0]  %s2, 1024, %s46, [#allocation6], 64, 64, 4
    $region13: #{tpu_custom_call.1} parent=1 // pred_fallthru
      _
    // Predicated region
    $region14: #{tpu_custom_call.1} parent=1 // pred_check
      _
    $region15: #{tpu_custom_call.1} parent=1 // pred_check_branch
      %53 = sbr.rel (0) target = $region17
    $region16: #{tpu_custom_call.1} parent=1 // pred_region
      %s55 = ssub.s32 1024, 1024
      %56 = vsyncadd [#allocation9], %s55
      %s57 = sshll.u32 [#allocation8], 4
      %s58 = int_to_ptr.vmem [resolvable:$true] %s57
      %63 = dma.hbm_to_vmem [thread:$0]  %s3, 1024, %s58, [#allocation9], 64, 64, 4
    $region17: #{tpu_custom_call.1} parent=1 // pred_fallthru
      _
    // Predicated region
    $region18: #{tpu_custom_call.1} parent=1 // pred_check
      _
    $region19: #{tpu_custom_call.1} parent=1 // pred_check_branch
      %65 = sbr.rel (0) target = $region21
    $region20: #{tpu_custom_call.1} parent=1 // pred_region
      %s67 = ssub.s32 1024, 1024
      %68 = vsyncadd [#allocation9], %s67
      %s69 = sshll.u32 [#allocation10], 4
      %s70 = int_to_ptr.vmem [resolvable:$true] %s69
      %75 = dma.hbm_to_vmem [thread:$0]  %s4, 1024, %s70, [#allocation9], 64, 64, 4
    $region21: #{tpu_custom_call.1} parent=1 // pred_fallthru
      _
    // Predicated region
    $region22: #{tpu_custom_call.1} parent=1 // pred_check
      _
    $region23: #{tpu_custom_call.1} parent=1 // pred_check_branch
      %77 = sbr.rel (0) target = $region25
    $region24: #{tpu_custom_call.1} parent=1 // pred_region
      _
    $region25: #{tpu_custom_call.1} parent=1 // pred_fallthru
      _
    // Predicated region
    $region26: #{tpu_custom_call.1} parent=1 // pred_check
      _
    $region27: #{tpu_custom_call.1} parent=1 // pred_check_branch
      %79 = sbr.rel (0) target = $region29
    $region28: #{tpu_custom_call.1} parent=1 // pred_region
      _
    $region29: #{tpu_custom_call.1} parent=1 // pred_fallthru
      _
    // Predicated region
    $region30: #{tpu_custom_call.1} parent=1 // pred_check
      _
    $region31: #{tpu_custom_call.1} parent=1 // pred_check_branch
      %81 = sbr.rel (0) target = $region33
    $region32: #{tpu_custom_call.1} parent=1 // pred_region
      %82 = dma.done [#allocation3], 128
    $region33: #{tpu_custom_call.1} parent=1 // pred_fallthru
      _
    // Predicated region
    $region34: #{tpu_custom_call.1} parent=1 // pred_check
      _
    $region35: #{tpu_custom_call.1} parent=1 // pred_check_branch
      %84 = sbr.rel (0) target = $region37
    $region36: #{tpu_custom_call.1} parent=1 // pred_region
      %85 = dma.done [#allocation6], 1024
    $region37: #{tpu_custom_call.1} parent=1 // pred_fallthru
      _
    // Predicated region
    $region38: #{tpu_custom_call.1} parent=1 // pred_check
      _
    $region39: #{tpu_custom_call.1} parent=1 // pred_check_branch
      %87 = sbr.rel (0) target = $region41
    $region40: #{tpu_custom_call.1} parent=1 // pred_region
      %88 = dma.done [#allocation6], 1024
    $region41: #{tpu_custom_call.1} parent=1 // pred_fallthru
      _
    // Predicated region
    $region42: #{tpu_custom_call.1} parent=1 // pred_check
      _
    $region43: #{tpu_custom_call.1} parent=1 // pred_check_branch
      %90 = sbr.rel (0) target = $region45
    $region44: #{tpu_custom_call.1} parent=1 // pred_region
      %91 = dma.done [#allocation9], 1024
    $region45: #{tpu_custom_call.1} parent=1 // pred_fallthru
      _
    // Predicated region
    $region46: #{tpu_custom_call.1} parent=1 // pred_check
      _
    $region47: #{tpu_custom_call.1} parent=1 // pred_check_branch
      %93 = sbr.rel (0) target = $region49
    $region48: #{tpu_custom_call.1} parent=1 // pred_region
      %94 = dma.done [#allocation9], 1024
    $region49: #{tpu_custom_call.1} parent=1 // pred_fallthru
      _
    %v96 = vld [vmem:[#allocation2] sm:$0xf]
    %v97 = vld [vmem:[#allocation2 + $0x4] sm:$0xf]
    %v98 = vld [vmem:[#allocation5] sm:$0xf]
    %v99 = vld [vmem:[#allocation5 + $0x4] sm:$0xf]
    %v100 = vld [vmem:[#allocation5 + $0x8] sm:$0xf]
    %v101 = vld [vmem:[#allocation5 + $0xc] sm:$0xf]
    %v102 = vld [vmem:[#allocation5 + $0x10] sm:$0xf]
    %v103 = vld [vmem:[#allocation5 + $0x14] sm:$0xf]
    %v104 = vld [vmem:[#allocation5 + $0x18] sm:$0xf]
    %v105 = vld [vmem:[#allocation5 + $0x1c] sm:$0xf]
    %v106 = vld [vmem:[#allocation5 + $0x20] sm:$0xf]
    %v107 = vld [vmem:[#allocation5 + $0x24] sm:$0xf]
    %v108 = vld [vmem:[#allocation5 + $0x28] sm:$0xf]
    %v109 = vld [vmem:[#allocation5 + $0x2c] sm:$0xf]
    %v110 = vld [vmem:[#allocation5 + $0x30] sm:$0xf]
    %v111 = vld [vmem:[#allocation5 + $0x34] sm:$0xf]
    %v112 = vld [vmem:[#allocation5 + $0x38] sm:$0xf]
    %v113 = vld [vmem:[#allocation5 + $0x3c] sm:$0xf]
    %v114 = vld [vmem:[%s5] sm:$0x1]
    %v115 = vlaneseq
    %v116 = vshrl.u32 %v115, 7
    %v117 = vsub.s32 0, %v116
    %v118 = vrot.slane %v114, %v117
    %v121 = vunpack.c.l.b16 %v96
    %v122 = vunpack.c.l.b16 %v97
    %v123 = vpack.c.b16 %v122, %v121
    %v141 = vunpack.c.l.b16 %v98
    %v142 = vunpack.c.l.b16 %v99
    %v143 = vunpack.c.l.b16 %v100
    %v144 = vunpack.c.l.b16 %v101
    %v145 = vunpack.c.l.b16 %v102
    %v146 = vunpack.c.l.b16 %v103
    %v147 = vunpack.c.l.b16 %v104
    %v148 = vunpack.c.l.b16 %v105
    %v149 = vunpack.c.l.b16 %v106
    %v150 = vunpack.c.l.b16 %v107
    %v151 = vunpack.c.l.b16 %v108
    %v152 = vunpack.c.l.b16 %v109
    %v153 = vunpack.c.l.b16 %v110
    %v154 = vunpack.c.l.b16 %v111
    %v155 = vunpack.c.l.b16 %v112
    %v156 = vunpack.c.l.b16 %v113
    %v157 = vpack.c.b16 %v142, %v141
    %v158 = vpack.c.b16 %v144, %v143
    %v159 = vpack.c.b16 %v146, %v145
    %v160 = vpack.c.b16 %v148, %v147
    %v161 = vpack.c.b16 %v150, %v149
    %v162 = vpack.c.b16 %v152, %v151
    %v163 = vpack.c.b16 %v154, %v153
    %v164 = vpack.c.b16 %v156, %v155
    %173 = vmatprep.subr.bf16.mxu0 0
    %174 = vmatpush1.bf16.msra.mxu0 %v164
    %175 = vmatprep.subr.bf16.mxu0 0
    %176 = vmatpush1.bf16.msra.mxu0 %v163
    %177 = vmatprep.subr.bf16.mxu0 0
    %178 = vmatpush1.bf16.msra.mxu0 %v162
    %179 = vmatprep.subr.bf16.mxu0 0
    %180 = vmatpush1.bf16.msra.mxu0 %v161
    %181 = vmatprep.subr.bf16.mxu0 0
    %182 = vmatpush1.bf16.msra.mxu0 %v160
    %183 = vmatprep.subr.bf16.mxu0 0
    %184 = vmatpush1.bf16.msra.mxu0 %v159
    %185 = vmatprep.subr.bf16.mxu0 0
    %186 = vmatpush1.bf16.msra.mxu0 %v158
    %187 = vmatprep.subr.bf16.mxu0 0
    %188 = vmatpush1.bf16.msra.mxu0 %v157
    %189 = vmatprep.subr.bf16.mxu0 0
    %190 = vmatpush2.bf16.msra.mxu0 0
    %191 = vmatprep.subr.bf16.mxu0 0
    %192 = vmatpush2.bf16.msra.mxu0 0
    %193 = vmatprep.subr.bf16.mxu0 0
    %194 = vmatpush2.bf16.msra.mxu0 0
    %195 = vmatprep.subr.bf16.mxu0 0
    %196 = vmatpush2.bf16.msra.mxu0 0
    %197 = vmatprep.subr.bf16.mxu0 0
    %198 = vmatpush2.bf16.msra.mxu0 0
    %199 = vmatprep.subr.bf16.mxu0 0
    %200 = vmatpush2.bf16.msra.mxu0 0
    %201 = vmatprep.subr.bf16.mxu0 0
    %202 = vmatpush2.bf16.msra.mxu0 0
    %203 = vmatprep.subr.bf16.mxu0 0
    %204 = vmatpush2.bf16.msra.mxu0 0
    %205 = vmatprep.mubr.bf16.mxu0 0
    %206 = vmatmul.mubr.bf16.gmra.mxu0 %v123
    %v207 = vpop.f32.mrf.mxu0
    %v208 = vadd.f32 %v118, %v207
    %v209 = vpop.f32.mrf.mxu0
    %v210 = vpop.f32.mrf.mxu0
    %v211 = vadd.f32 %v118, %v210
    %v212 = vpop.f32.mrf.mxu0
    %213 = vdwg.mxu0
    %v214 = vmax.f32 %v208, 0.0
    %v215 = vmax.f32 %v211, 0.0
    %v216 = vpack.c.bf16 %v215, %v214
    %v217 = vld [vmem:[#allocation7] sm:$0xf]
    %v218 = vld [vmem:[#allocation7 + $0x4] sm:$0xf]
    %v219 = vld [vmem:[#allocation7 + $0x8] sm:$0xf]
    %v220 = vld [vmem:[#allocation7 + $0xc] sm:$0xf]
    %v221 = vld [vmem:[#allocation7 + $0x10] sm:$0xf]
    %v222 = vld [vmem:[#allocation7 + $0x14] sm:$0xf]
    %v223 = vld [vmem:[#allocation7 + $0x18] sm:$0xf]
    %v224 = vld [vmem:[#allocation7 + $0x1c] sm:$0xf]
    %v225 = vld [vmem:[#allocation7 + $0x20] sm:$0xf]
    %v226 = vld [vmem:[#allocation7 + $0x24] sm:$0xf]
    %v227 = vld [vmem:[#allocation7 + $0x28] sm:$0xf]
    %v228 = vld [vmem:[#allocation7 + $0x2c] sm:$0xf]
    %v229 = vld [vmem:[#allocation7 + $0x30] sm:$0xf]
    %v230 = vld [vmem:[#allocation7 + $0x34] sm:$0xf]
    %v231 = vld [vmem:[#allocation7 + $0x38] sm:$0xf]
    %v232 = vld [vmem:[#allocation7 + $0x3c] sm:$0xf]
    %v233 = vld [vmem:[%s5 + $0x1] sm:$0x1]
    %v234 = vlaneseq
    %v235 = vshrl.u32 %v234, 7
    %v236 = vsub.s32 0, %v235
    %v237 = vrot.slane %v233, %v236
    %v254 = vunpack.c.l.b16 %v217
    %v255 = vunpack.c.l.b16 %v218
    %v256 = vunpack.c.l.b16 %v219
    %v257 = vunpack.c.l.b16 %v220
    %v258 = vunpack.c.l.b16 %v221
    %v259 = vunpack.c.l.b16 %v222
    %v260 = vunpack.c.l.b16 %v223
    %v261 = vunpack.c.l.b16 %v224
    %v262 = vunpack.c.l.b16 %v225
    %v263 = vunpack.c.l.b16 %v226
    %v264 = vunpack.c.l.b16 %v227
    %v265 = vunpack.c.l.b16 %v228
    %v266 = vunpack.c.l.b16 %v229
    %v267 = vunpack.c.l.b16 %v230
    %v268 = vunpack.c.l.b16 %v231
    %v269 = vunpack.c.l.b16 %v232
    %v270 = vpack.c.b16 %v255, %v254
    %v271 = vpack.c.b16 %v257, %v256
    %v272 = vpack.c.b16 %v259, %v258
    %v273 = vpack.c.b16 %v261, %v260
    %v274 = vpack.c.b16 %v263, %v262
    %v275 = vpack.c.b16 %v265, %v264
    %v276 = vpack.c.b16 %v267, %v266
    %v277 = vpack.c.b16 %v269, %v268
    %286 = vmatprep.subr.bf16.mxu0 0
    %287 = vmatpush1.bf16.msra.mxu0 %v277
    %288 = vmatprep.subr.bf16.mxu0 0
    %289 = vmatpush1.bf16.msra.mxu0 %v276
    %290 = vmatprep.subr.bf16.mxu0 0
    %291 = vmatpush1.bf16.msra.mxu0 %v275
    %292 = vmatprep.subr.bf16.mxu0 0
    %293 = vmatpush1.bf16.msra.mxu0 %v274
    %294 = vmatprep.subr.bf16.mxu0 0
    %295 = vmatpush1.bf16.msra.mxu0 %v273
    %296 = vmatprep.subr.bf16.mxu0 0
    %297 = vmatpush1.bf16.msra.mxu0 %v272
    %298 = vmatprep.subr.bf16.mxu0 0
    %299 = vmatpush1.bf16.msra.mxu0 %v271
    %300 = vmatprep.subr.bf16.mxu0 0
    %301 = vmatpush1.bf16.msra.mxu0 %v270
    %302 = vmatprep.subr.bf16.mxu0 0
    %303 = vmatpush2.bf16.msra.mxu0 0
    %304 = vmatprep.subr.bf16.mxu0 0
    %305 = vmatpush2.bf16.msra.mxu0 0
    %306 = vmatprep.subr.bf16.mxu0 0
    %307 = vmatpush2.bf16.msra.mxu0 0
    %308 = vmatprep.subr.bf16.mxu0 0
    %309 = vmatpush2.bf16.msra.mxu0 0
    %310 = vmatprep.subr.bf16.mxu0 0
    %311 = vmatpush2.bf16.msra.mxu0 0
    %312 = vmatprep.subr.bf16.mxu0 0
    %313 = vmatpush2.bf16.msra.mxu0 0
    %314 = vmatprep.subr.bf16.mxu0 0
    %315 = vmatpush2.bf16.msra.mxu0 0
    %316 = vmatprep.subr.bf16.mxu0 0
    %317 = vmatpush2.bf16.msra.mxu0 0
    %318 = vmatprep.mubr.bf16.mxu0 0
    %319 = vmatmul.mubr.bf16.gmra.mxu0 %v216
    %v320 = vpop.f32.mrf.mxu0
    %v321 = vadd.f32 %v237, %v320
    %v322 = vpop.f32.mrf.mxu0
    %v323 = vpop.f32.mrf.mxu0
    %v324 = vadd.f32 %v237, %v323
    %v325 = vpop.f32.mrf.mxu0
    %326 = vdwg.mxu0
    %v327 = vmax.f32 %v321, 0.0
    %v328 = vmax.f32 %v324, 0.0
    %v329 = vpack.c.bf16 %v328, %v327
    %v330 = vld [vmem:[#allocation8] sm:$0xf]
    %v331 = vld [vmem:[#allocation8 + $0x4] sm:$0xf]
    %v332 = vld [vmem:[#allocation8 + $0x8] sm:$0xf]
    %v333 = vld [vmem:[#allocation8 + $0xc] sm:$0xf]
    %v334 = vld [vmem:[#allocation8 + $0x10] sm:$0xf]
    %v335 = vld [vmem:[#allocation8 + $0x14] sm:$0xf]
    %v336 = vld [vmem:[#allocation8 + $0x18] sm:$0xf]
    %v337 = vld [vmem:[#allocation8 + $0x1c] sm:$0xf]
    %v338 = vld [vmem:[#allocation8 + $0x20] sm:$0xf]
    %v339 = vld [vmem:[#allocation8 + $0x24] sm:$0xf]
    %v340 = vld [vmem:[#allocation8 + $0x28] sm:$0xf]
    %v341 = vld [vmem:[#allocation8 + $0x2c] sm:$0xf]
    %v342 = vld [vmem:[#allocation8 + $0x30] sm:$0xf]
    %v343 = vld [vmem:[#allocation8 + $0x34] sm:$0xf]
    %v344 = vld [vmem:[#allocation8 + $0x38] sm:$0xf]
    %v345 = vld [vmem:[#allocation8 + $0x3c] sm:$0xf]
    %v346 = vld [vmem:[%s5 + $0x2] sm:$0x1]
    %v347 = vlaneseq
    %v348 = vshrl.u32 %v347, 7
    %v349 = vsub.s32 0, %v348
    %v350 = vrot.slane %v346, %v349
    %v367 = vunpack.c.l.b16 %v330
    %v368 = vunpack.c.l.b16 %v331
    %v369 = vunpack.c.l.b16 %v332
    %v370 = vunpack.c.l.b16 %v333
    %v371 = vunpack.c.l.b16 %v334
    %v372 = vunpack.c.l.b16 %v335
    %v373 = vunpack.c.l.b16 %v336
    %v374 = vunpack.c.l.b16 %v337
    %v375 = vunpack.c.l.b16 %v338
    %v376 = vunpack.c.l.b16 %v339
    %v377 = vunpack.c.l.b16 %v340
    %v378 = vunpack.c.l.b16 %v341
    %v379 = vunpack.c.l.b16 %v342
    %v380 = vunpack.c.l.b16 %v343
    %v381 = vunpack.c.l.b16 %v344
    %v382 = vunpack.c.l.b16 %v345
    %v383 = vpack.c.b16 %v368, %v367
    %v384 = vpack.c.b16 %v370, %v369
    %v385 = vpack.c.b16 %v372, %v371
    %v386 = vpack.c.b16 %v374, %v373
    %v387 = vpack.c.b16 %v376, %v375
    %v388 = vpack.c.b16 %v378, %v377
    %v389 = vpack.c.b16 %v380, %v379
    %v390 = vpack.c.b16 %v382, %v381
    %399 = vmatprep.subr.bf16.mxu0 0
    %400 = vmatpush1.bf16.msra.mxu0 %v390
    %401 = vmatprep.subr.bf16.mxu0 0
    %402 = vmatpush1.bf16.msra.mxu0 %v389
    %403 = vmatprep.subr.bf16.mxu0 0
    %404 = vmatpush1.bf16.msra.mxu0 %v388
    %405 = vmatprep.subr.bf16.mxu0 0
    %406 = vmatpush1.bf16.msra.mxu0 %v387
    %407 = vmatprep.subr.bf16.mxu0 0
    %408 = vmatpush1.bf16.msra.mxu0 %v386
    %409 = vmatprep.subr.bf16.mxu0 0
    %410 = vmatpush1.bf16.msra.mxu0 %v385
    %411 = vmatprep.subr.bf16.mxu0 0
    %412 = vmatpush1.bf16.msra.mxu0 %v384
    %413 = vmatprep.subr.bf16.mxu0 0
    %414 = vmatpush1.bf16.msra.mxu0 %v383
    %415 = vmatprep.subr.bf16.mxu0 0
    %416 = vmatpush2.bf16.msra.mxu0 0
    %417 = vmatprep.subr.bf16.mxu0 0
    %418 = vmatpush2.bf16.msra.mxu0 0
    %419 = vmatprep.subr.bf16.mxu0 0
    %420 = vmatpush2.bf16.msra.mxu0 0
    %421 = vmatprep.subr.bf16.mxu0 0
    %422 = vmatpush2.bf16.msra.mxu0 0
    %423 = vmatprep.subr.bf16.mxu0 0
    %424 = vmatpush2.bf16.msra.mxu0 0
    %425 = vmatprep.subr.bf16.mxu0 0
    %426 = vmatpush2.bf16.msra.mxu0 0
    %427 = vmatprep.subr.bf16.mxu0 0
    %428 = vmatpush2.bf16.msra.mxu0 0
    %429 = vmatprep.subr.bf16.mxu0 0
    %430 = vmatpush2.bf16.msra.mxu0 0
    %431 = vmatprep.mubr.bf16.mxu0 0
    %432 = vmatmul.mubr.bf16.gmra.mxu0 %v329
    %v433 = vpop.f32.mrf.mxu0
    %v434 = vadd.f32 %v350, %v433
    %v435 = vpop.f32.mrf.mxu0
    %v436 = vpop.f32.mrf.mxu0
    %v437 = vadd.f32 %v350, %v436
    %v438 = vpop.f32.mrf.mxu0
    %439 = vdwg.mxu0
    %v440 = vmax.f32 %v434, 0.0
    %v441 = vmax.f32 %v437, 0.0
    %v442 = vpack.c.bf16 %v441, %v440
    %v443 = vld [vmem:[#allocation10] sm:$0xf]
    %v444 = vld [vmem:[#allocation10 + $0x4] sm:$0xf]
    %v445 = vld [vmem:[#allocation10 + $0x8] sm:$0xf]
    %v446 = vld [vmem:[#allocation10 + $0xc] sm:$0xf]
    %v447 = vld [vmem:[#allocation10 + $0x10] sm:$0xf]
    %v448 = vld [vmem:[#allocation10 + $0x14] sm:$0xf]
    %v449 = vld [vmem:[#allocation10 + $0x18] sm:$0xf]
    %v450 = vld [vmem:[#allocation10 + $0x1c] sm:$0xf]
    %v451 = vld [vmem:[#allocation10 + $0x20] sm:$0xf]
    %v452 = vld [vmem:[#allocation10 + $0x24] sm:$0xf]
    %v453 = vld [vmem:[#allocation10 + $0x28] sm:$0xf]
    %v454 = vld [vmem:[#allocation10 + $0x2c] sm:$0xf]
    %v455 = vld [vmem:[#allocation10 + $0x30] sm:$0xf]
    %v456 = vld [vmem:[#allocation10 + $0x34] sm:$0xf]
    %v457 = vld [vmem:[#allocation10 + $0x38] sm:$0xf]
    %v458 = vld [vmem:[#allocation10 + $0x3c] sm:$0xf]
    %v459 = vld [vmem:[%s6] sm:$0x1]
    %v461 = vlaneseq
    %v462 = vshrl.u32 %v461, 7
    %v463 = vsub.s32 0, %v462
    %v464 = vrot.slane %v459, %v463
    %v482 = vunpack.c.l.b16 %v443
    %v483 = vunpack.c.l.b16 %v444
    %v484 = vunpack.c.l.b16 %v445
    %v485 = vunpack.c.l.b16 %v446
    %v486 = vunpack.c.l.b16 %v447
    %v487 = vunpack.c.l.b16 %v448
    %v488 = vunpack.c.l.b16 %v449
    %v489 = vunpack.c.l.b16 %v450
    %v490 = vunpack.c.l.b16 %v451
    %v491 = vunpack.c.l.b16 %v452
    %v492 = vunpack.c.l.b16 %v453
    %v493 = vunpack.c.l.b16 %v454
    %v494 = vunpack.c.l.b16 %v455
    %v495 = vunpack.c.l.b16 %v456
    %v496 = vunpack.c.l.b16 %v457
    %v497 = vunpack.c.l.b16 %v458
    %v498 = vpack.c.b16 %v483, %v482
    %v499 = vpack.c.b16 %v485, %v484
    %v500 = vpack.c.b16 %v487, %v486
    %v501 = vpack.c.b16 %v489, %v488
    %v502 = vpack.c.b16 %v491, %v490
    %v503 = vpack.c.b16 %v493, %v492
    %v504 = vpack.c.b16 %v495, %v494
    %v505 = vpack.c.b16 %v497, %v496
    %514 = vmatprep.subr.bf16.mxu0 0
    %515 = vmatpush1.bf16.msra.mxu0 %v505
    %516 = vmatprep.subr.bf16.mxu0 0
    %517 = vmatpush1.bf16.msra.mxu0 %v504
    %518 = vmatprep.subr.bf16.mxu0 0
    %519 = vmatpush1.bf16.msra.mxu0 %v503
    %520 = vmatprep.subr.bf16.mxu0 0
    %521 = vmatpush1.bf16.msra.mxu0 %v502
    %522 = vmatprep.subr.bf16.mxu0 0
    %523 = vmatpush1.bf16.msra.mxu0 %v501
    %524 = vmatprep.subr.bf16.mxu0 0
    %525 = vmatpush1.bf16.msra.mxu0 %v500
    %526 = vmatprep.subr.bf16.mxu0 0
    %527 = vmatpush1.bf16.msra.mxu0 %v499
    %528 = vmatprep.subr.bf16.mxu0 0
    %529 = vmatpush1.bf16.msra.mxu0 %v498
    %530 = vmatprep.subr.bf16.mxu0 0
    %531 = vmatpush2.bf16.msra.mxu0 0
    %532 = vmatprep.subr.bf16.mxu0 0
    %533 = vmatpush2.bf16.msra.mxu0 0
    %534 = vmatprep.subr.bf16.mxu0 0
    %535 = vmatpush2.bf16.msra.mxu0 0
    %536 = vmatprep.subr.bf16.mxu0 0
    %537 = vmatpush2.bf16.msra.mxu0 0
    %538 = vmatprep.subr.bf16.mxu0 0
    %539 = vmatpush2.bf16.msra.mxu0 0
    %540 = vmatprep.subr.bf16.mxu0 0
    %541 = vmatpush2.bf16.msra.mxu0 0
    %542 = vmatprep.subr.bf16.mxu0 0
    %543 = vmatpush2.bf16.msra.mxu0 0
    %544 = vmatprep.subr.bf16.mxu0 0
    %545 = vmatpush2.bf16.msra.mxu0 0
    %546 = vmatprep.mubr.bf16.mxu0 0
    %547 = vmatmul.mubr.bf16.gmra.mxu0 %v442
    %v548 = vpop.f32.mrf.mxu0
    %v549 = vadd.f32 %v464, %v548
    %v550 = vpop.f32.mrf.mxu0
    %v551 = vpop.f32.mrf.mxu0
    %v552 = vadd.f32 %v464, %v551
    %v553 = vpop.f32.mrf.mxu0
    %554 = vdwg.mxu0
    %555 = vst [vmem:[#allocation11] sm:$0xff] %v549
    %556 = vst [vmem:[#allocation11 + $0x8] sm:$0xff] %v552
    // Predicated region
    $region50: #{tpu_custom_call.1} parent=1 // pred_check
      _
    $region51: #{tpu_custom_call.1} parent=1 // pred_check_branch
      %558 = sbr.rel (0) target = $region53
    $region52: #{tpu_custom_call.1} parent=1 // pred_region
      %s560 = ssub.s32 256, 256
      %561 = vsyncadd [#allocation4], %s560
      %s562 = sshll.u32 [#allocation11], 4
      %s563 = int_to_ptr.vmem [resolvable:$true] %s562
      %568 = dma.vmem_to_hbm [thread:$0]  %s563, 256, %s7, [#allocation4], 128, 128, 8
    $region53: #{tpu_custom_call.1} parent=1 // pred_fallthru
      _
    // Predicated region
    $region54: #{tpu_custom_call.1} parent=1 // pred_check
      _
    $region55: #{tpu_custom_call.1} parent=1 // pred_check_branch
      %570 = sbr.rel (0) target = $region57
    $region56: #{tpu_custom_call.1} parent=1 // pred_region
      %571 = dma.done [#allocation4], 256
    $region57: #{tpu_custom_call.1} parent=1 // pred_fallthru
      _
    %572 = vsyncpa [#allocation3], 1
    %573 = vsyncpa [#allocation6], 1
    %574 = vsyncpa [#allocation9], 1
    %575 = vsyncpa [#allocation4], 1

</llo_original>
